<compile_context>
chip_gen: v7x
topology: tpu7x:2x2x1
jax: 0.10.0
libtpu: 0.0.40
codegen_flags: <defaults>
</compile_context>

<pallas_src>
import functools

import numpy as np
import jax
import jax.numpy as jnp
from jax.experimental import pallas as pl
from jax.experimental.pallas import tpu as pltpu

N_GRID = 15
N_RBF = N_GRID * N_GRID        # 225 RBF units
IN_FEATURES = 2

D_EXT = 8                      # extended/padded feature rows [x0, x1, 1, |x|^2, 0..]
J_PAD = 256                    # padded RBF dim (multiple of 128)
OUT_ROWS = 8                   # sublane-padded linear-output rows (row 0 real)
LANE = 128                     # lane width / batch-pad granularity
TB_MAX = 2048                  # max batch rows per grid step (sweepable 1024-4096)


def rbf_network_kernel(xt_ref, m_ref, w_ref, o_ref):
    """Fused RBF(2 -> 225, gaussian) + Linear(225 -> 1), feature-major.

    xt_ref : (D_EXT, TB)      extended inputs [x0, x1, 1, ||x||^2, 0, 0, 0, 0]
    m_ref  : (J_PAD, D_EXT)   folded RBF operand (padded rows are zero)
    w_ref  : (OUT_ROWS, J_PAD) linear weight; row 0 real, col N_RBF carries bias
    o_ref  : (1, TB)          real output row
    """
    # exponent[j, b] = -||x_b - c_j||^2 / sigma_j^2   (single MXU matmul)
    expo = jnp.dot(m_ref[...], xt_ref[...], preferred_element_type=jnp.float32)
    # gaussian basis on the EUP; padded lanes give exp(0) = 1 (zero weight / bias lane)
    phi = jnp.exp(expo)                                         # (J_PAD, TB)
    # fused Linear(225 -> 1) (+ bias via the phi==1 lane); row 0 is the result
    out = jnp.dot(w_ref[...], phi, preferred_element_type=jnp.float32)  # (OUT_ROWS, TB)
    o_ref[...] = out[0:1, :].astype(o_ref.dtype)


@functools.lru_cache(maxsize=None)
def _build_call(b_pad, tb):
    grid = (b_pad // tb,)
    return pl.pallas_call(
        rbf_network_kernel,
        out_shape=jax.ShapeDtypeStruct((1, b_pad), jnp.float32),
        grid=grid,
        in_specs=[
            pl.BlockSpec((D_EXT, tb), lambda i: (0, i)),          # x_ext tile
            pl.BlockSpec((J_PAD, D_EXT), lambda i: (0, 0)),       # folded centres M
            pl.BlockSpec((OUT_ROWS, J_PAD), lambda i: (0, 0)),    # linear weight (+bias)
        ],
        out_specs=pl.BlockSpec((1, tb), lambda i: (0, i)),
        compiler_params=pltpu.CompilerParams(
            dimension_semantics=("parallel",)),
    )


def _tiling(bsz):
    """Pick (b_pad, tb): tb multiple of 128, tb | b_pad, >=2 grid steps if possible."""
    b128 = ((bsz + LANE - 1) // LANE) * LANE
    tb = min(TB_MAX, b128)
    # v7x has 2 TensorCores: give the "parallel" batch axis >= 2 grid steps
    # whenever the batch is big enough (near-neutral on single-TC v5e/v6e).
    if b128 // tb < 2 and b128 >= 2 * LANE:
        tb = max(LANE, ((b128 // 2) // LANE) * LANE)
    b_pad = ((b128 + tb - 1) // tb) * tb
    return b_pad, tb


@functools.partial(jax.jit, static_argnames=("b_pad", "tb"))
def _forward(x, m, w, *, b_pad, tb):
    bsz = x.shape[0]
    x = x.astype(jnp.float32)
    # Feature-major extended input (built under jit -> fuses with the kernel call).
    xt = jnp.zeros((D_EXT, b_pad), jnp.float32)
    xt = xt.at[:IN_FEATURES, :bsz].set(x.T)
    xt = xt.at[IN_FEATURES, :bsz].set(1.0)
    xt = xt.at[IN_FEATURES + 1, :bsz].set(jnp.sum(x * x, axis=-1))
    out = _build_call(b_pad, tb)(xt, m, w)          # (1, b_pad); padded cols = garbage
    return out[0, :bsz, None]                       # (B, 1), like the torch module


class RBFNetworkPallas:
    """Mirror of the PyTorch RBFNetwork forward pass."""

    def __init__(self, lin_weight, lin_bias, log_sigmas=None):
        # Fixed 15x15 (theta, omega) centre grid, exactly as in the reference.
        theta = np.linspace(-np.pi, np.pi, N_GRID)
        omega = np.linspace(-5.0 / 2.0 * np.pi, 5.0 / 2.0 * np.pi, N_GRID)
        centres = np.array([[t, w] for t in theta for w in omega],
                           dtype=np.float32)                       # (225, 2)
        if log_sigmas is None:
            # torch-rbf RBF layer initializes log_sigmas to 0 (sigma = 1).
            log_sigmas = np.zeros((N_RBF,), dtype=np.float32)
        log_sigmas = np.asarray(log_sigmas, dtype=np.float32)
        lin_weight = np.asarray(lin_weight, dtype=np.float32).reshape(-1)  # (225,)
        lin_bias = np.asarray(lin_bias, dtype=np.float32).reshape(-1)      # (1,)

        # Fold 1/sigma^2, ||c||^2 and the -2 factor into one matmul operand M,
        # so the kernel's only per-element work besides matmuls is the EUP exp.
        # NOTE: this is the Gram form of the distance; f32 cancellation near a
        # centre is ~1e-5 absolute, within the validation tolerance below.
        isig2 = np.exp(-2.0 * log_sigmas)                          # 1 / sigma^2
        m = np.zeros((J_PAD, D_EXT), dtype=np.float32)
        m[:N_RBF, :IN_FEATURES] = 2.0 * isig2[:, None] * centres
        m[:N_RBF, IN_FEATURES] = -isig2 * np.sum(centres * centres, axis=-1)
        m[:N_RBF, IN_FEATURES + 1] = -isig2
        # rows j >= N_RBF stay zero -> exponent 0 -> phi == 1 in padded lanes.

        w = np.zeros((OUT_ROWS, J_PAD), dtype=np.float32)
        w[0, :N_RBF] = lin_weight
        w[0, N_RBF] = lin_bias[0]   # bias rides the phi==1 padded lane, for free
        # Invariant: all other padded lanes / rows carry zero weight, so their
        # phi == 1 values can never leak into the result.
        assert not np.any(w[0, N_RBF + 1:]) and not np.any(w[1:, :])

        self.m = jnp.asarray(m)
        self.w = jnp.asarray(w)

        # Unpadded copies kept only for the pure-JAX reference check.
        self.centres = jnp.asarray(centres)
        self.log_sigmas = jnp.asarray(log_sigmas)

    def __call__(self, x):
        x = jnp.asarray(x, dtype=jnp.float32)          # (B, 2)
        b_pad, tb = _tiling(x.shape[0])
        return _forward(x, self.m, self.w, b_pad=b_pad, tb=tb)


def rbf_network_reference(x, centres, log_sigmas, lin_w, lin_b):
    """Pure-JAX reference computed exactly the torch-rbf way."""
    diff = x[:, None, :] - centres[None, :, :]                       # (B, 225, 2)
    d = jnp.sqrt(jnp.sum(diff * diff, axis=-1)) / jnp.exp(log_sigmas)[None, :]
    phi = jnp.exp(-(d * d))
    return phi @ lin_w.T + lin_b                                     # (B, 1)


if __name__ == "__main__":
    key = jax.random.PRNGKey(0)
    kx1, kx2, kw, kb = jax.random.split(key, 4)

    # Small deterministic example input: B=8 states (theta, omega).
    B = 8
    theta_in = jax.random.uniform(kx1, (B, 1), minval=-np.pi, maxval=np.pi)
    omega_in = jax.random.uniform(kx2, (B, 1), minval=-2.5 * np.pi, maxval=2.5 * np.pi)
    x = jnp.concatenate([theta_in, omega_in], axis=-1).astype(jnp.float32)  # (8, 2)

    # Deterministic Linear(225, 1) params (torch default init bound = 1/sqrt(225)).
    bound = 1.0 / np.sqrt(N_RBF)
    lin_w = jax.random.uniform(kw, (1, N_RBF), minval=-bound, maxval=bound,
                               dtype=jnp.float32)
    lin_b = jax.random.uniform(kb, (1,), minval=-bound, maxval=bound,
                               dtype=jnp.float32)

    model = RBFNetworkPallas(lin_w, lin_b)

    out = jax.block_until_ready(model(x))              # (8, 1)
    ref = rbf_network_reference(x, model.centres, model.log_sigmas, lin_w, lin_b)
    np.testing.assert_allclose(np.asarray(out), np.asarray(ref),
                               rtol=1e-4, atol=5e-5)
    assert out.shape == (B, 1)
    assert np.all(np.isfinite(np.asarray(out)))

    # Exercise the multi-tile path (grid > 1 step, padded batch rows sliced off).
    B2 = 300
    x2 = jax.random.uniform(jax.random.PRNGKey(1), (B2, 2),
                            minval=-3.0, maxval=3.0, dtype=jnp.float32)
    out2 = jax.block_until_ready(model(x2))            # (300, 1)
    ref2 = rbf_network_reference(x2, model.centres, model.log_sigmas, lin_w, lin_b)
    np.testing.assert_allclose(np.asarray(out2), np.asarray(ref2),
                               rtol=1e-4, atol=5e-5)
    assert out2.shape == (B2, 1)

    print("KERNEL_OK")
</pallas_src>

<mosaic_0001>
module attributes {stable_mosaic.version = 11 : i64} {
  func.func @rbf_network_kernel(%arg0: i32, %arg1: memref<8x128xf32, #tpu.memory_space<vmem>>, %arg2: memref<256x8xf32, #tpu.memory_space<vmem>>, %arg3: memref<8x256xf32, #tpu.memory_space<vmem>>, %arg4: memref<1x128xf32, #tpu.memory_space<vmem>>) attributes {dimension_semantics = [#tpu.dimension_semantics<parallel>], iteration_bounds = array<i64: 1>, scalar_prefetch = 0 : i64, scratch_operands = 0 : i64, tpu.core_type = #tpu.core_type<tc>, window_params = [{transform_indices = @transform_0, window_bounds = array<i64: 8, 128>}, {pipeline_mode = #tpu.pipeline_mode<synchronous>, transform_indices = @transform_1, window_bounds = array<i64: 256, 8>}, {pipeline_mode = #tpu.pipeline_mode<synchronous>, transform_indices = @transform_2, window_bounds = array<i64: 8, 256>}, {transform_indices = @transform_3, window_bounds = array<i64: 1, 128>}]} {
    %c0 = arith.constant 0 : index
    %c0_0 = arith.constant 0 : index
    %0 = vector.load %arg2[%c0, %c0_0] : memref<256x8xf32, #tpu.memory_space<vmem>>, vector<256x8xf32>
    %c0_1 = arith.constant 0 : index
    %c0_2 = arith.constant 0 : index
    %1 = vector.load %arg1[%c0_1, %c0_2] : memref<8x128xf32, #tpu.memory_space<vmem>>, vector<8x128xf32>
    %cst = arith.constant dense<0.000000e+00> : vector<256x128xf32>
    %2 = tpu.matmul %0, %1, %cst {dimension_numbers = #tpu.dot_dimension_numbers<[1], [0], [0], [1], [0, 0, 1, 1], [], []>} : vector<256x8xf32>, vector<8x128xf32>, vector<256x128xf32> -> vector<256x128xf32>
    %3 = math.exp %2 : vector<256x128xf32>
    %c0_3 = arith.constant 0 : index
    %c0_4 = arith.constant 0 : index
    %4 = vector.load %arg3[%c0_3, %c0_4] : memref<8x256xf32, #tpu.memory_space<vmem>>, vector<8x256xf32>
    %cst_5 = arith.constant dense<0.000000e+00> : vector<8x128xf32>
    %5 = tpu.matmul %4, %3, %cst_5 {dimension_numbers = #tpu.dot_dimension_numbers<[1], [0], [0], [1], [0, 0, 1, 1], [], []>} : vector<8x256xf32>, vector<256x128xf32>, vector<8x128xf32> -> vector<8x128xf32>
    %6 = vector.extract_strided_slice %5 {offsets = [0, 0], sizes = [1, 128], strides = [1, 1]} : vector<8x128xf32> to vector<1x128xf32>
    %c0_6 = arith.constant 0 : index
    %c0_7 = arith.constant 0 : index
    %7 = vector.load %arg4[%c0_6, %c0_7] : memref<1x128xf32, #tpu.memory_space<vmem>>, vector<1x128xf32>
    tpu.vector_store %arg4[%c0_6, %c0_7], %6 {strides = array<i32>} : memref<1x128xf32, #tpu.memory_space<vmem>>, vector<1x128xf32>,
    return
  }
  func.func @transform_0(%arg0: i32) -> (i32, i32) {
    %c0_i32 = arith.constant 0 : i32
    %c0_i32_0 = arith.constant 0 : i32
    return %c0_i32, %arg0 : i32, i32
  }
  func.func @transform_1(%arg0: i32) -> (i32, i32) {
    %c0_i32 = arith.constant 0 : i32
    %c0_i32_0 = arith.constant 0 : i32
    %c0_i32_1 = arith.constant 0 : i32
    return %c0_i32, %c0_i32_0 : i32, i32
  }
  func.func @transform_2(%arg0: i32) -> (i32, i32) {
    %c0_i32 = arith.constant 0 : i32
    %c0_i32_0 = arith.constant 0 : i32
    %c0_i32_1 = arith.constant 0 : i32
    return %c0_i32, %c0_i32_0 : i32, i32
  }
  func.func @transform_3(%arg0: i32) -> (i32, i32) {
    %c0_i32 = arith.constant 0 : i32
    %c0_i32_0 = arith.constant 0 : i32
    return %c0_i32, %arg0 : i32, i32
  }
}

</mosaic_0001>

<llo_original>
// kernel: _forward.1
$region0: #{_forward.1}
  #allocation0 [shape = 'u32[]', space=smem, size = 0x4, offset = 0x4, fixed_abs, tag = 'smem constant byte address 0x4 - core index']
  #allocation1 [shape = 'u32[144,128]{1,0:T(1,128)}', space=vmem, size = 0x12000, scoped, tag = 'internal scratch']
  %s0 = inlined_call_operand.vmem [shape: f32[8,128], index: 0, kind: input, shape index: {}]
  %s1 = inlined_call_operand.vmem [shape: f32[256,8], index: 1, kind: input, shape index: {}]
  %s2 = inlined_call_operand.vmem [shape: f32[8,256], index: 2, kind: input, shape index: {}]
  %s3 = inlined_call_operand.vmem [shape: f32[1,128], index: 3, kind: output, shape index: {}]
  %s4 = sld [smem:[#allocation0]]
  $region22: #{_forward.1} parent=0
    _
  %s6 = ssub.s32 1, %s4
  %s7 = scalar_select 0, %s6, %s4
  // Predicated region
  $region2: #{_forward.1} parent=0 // pred_check
    _
  $region3: #{_forward.1} parent=0 // pred_check_branch
    %9 = sbr.rel (0) target = $region5
  $region4: #{_forward.1} parent=0 // pred_region
    _
  $region5: #{_forward.1} parent=0 // pred_fallthru
    _
  // Predicated region
  $region6: #{_forward.1} parent=0 // pred_check
    _
  $region7: #{_forward.1} parent=0 // pred_check_branch
    %11 = sbr.rel (0) target = $region9
  $region8: #{_forward.1} parent=0 // pred_region
    _
  $region9: #{_forward.1} parent=0 // pred_fallthru
    _
  // Predicated region
  $region10: #{_forward.1} parent=0 // pred_check
    _
  $region11: #{_forward.1} parent=0 // pred_check_branch
    %13 = sbr.rel (0) target = $region13
  $region12: #{_forward.1} parent=0 // pred_region
    _
  $region13: #{_forward.1} parent=0 // pred_fallthru
    _
  %v14 = vld [vmem:[%s1] sm:$0xff]
  %v15 = vld [vmem:[%s1 + $0x8] sm:$0xff]
  %v16 = vld [vmem:[%s1 + $0x10] sm:$0xff]
  %v17 = vld [vmem:[%s1 + $0x18] sm:$0xff]
  %v18 = vld [vmem:[%s1 + $0x20] sm:$0xff]
  %v19 = vld [vmem:[%s1 + $0x28] sm:$0xff]
  %v20 = vld [vmem:[%s1 + $0x30] sm:$0xff]
  %v21 = vld [vmem:[%s1 + $0x38] sm:$0xff]
  %v22 = vld [vmem:[%s1 + $0x40] sm:$0xff]
  %v23 = vld [vmem:[%s1 + $0x48] sm:$0xff]
  %v24 = vld [vmem:[%s1 + $0x50] sm:$0xff]
  %v25 = vld [vmem:[%s1 + $0x58] sm:$0xff]
  %v26 = vld [vmem:[%s1 + $0x60] sm:$0xff]
  %v27 = vld [vmem:[%s1 + $0x68] sm:$0xff]
  %v28 = vld [vmem:[%s1 + $0x70] sm:$0xff]
  %v29 = vld [vmem:[%s1 + $0x78] sm:$0xff]
  %v30 = vld [vmem:[%s1 + $0x80] sm:$0xff]
  %v31 = vld [vmem:[%s1 + $0x88] sm:$0xff]
  %v32 = vld [vmem:[%s1 + $0x90] sm:$0xff]
  %v33 = vld [vmem:[%s1 + $0x98] sm:$0xff]
  %v34 = vld [vmem:[%s1 + $0xa0] sm:$0xff]
  %v35 = vld [vmem:[%s1 + $0xa8] sm:$0xff]
  %v36 = vld [vmem:[%s1 + $0xb0] sm:$0xff]
  %v37 = vld [vmem:[%s1 + $0xb8] sm:$0xff]
  %v38 = vld [vmem:[%s1 + $0xc0] sm:$0xff]
  %v39 = vld [vmem:[%s1 + $0xc8] sm:$0xff]
  %v40 = vld [vmem:[%s1 + $0xd0] sm:$0xff]
  %v41 = vld [vmem:[%s1 + $0xd8] sm:$0xff]
  %v42 = vld [vmem:[%s1 + $0xe0] sm:$0xff]
  %v43 = vld [vmem:[%s1 + $0xe8] sm:$0xff]
  %v44 = vld [vmem:[%s1 + $0xf0] sm:$0xff]
  %v45 = vld [vmem:[%s1 + $0xf8] sm:$0xff]
  %v46 = vld [vmem:[%s0] sm:$0xff]
  %vm47 = vcmask 64512
  %v49 = vsel %vm47, %v14, 0
  %v52 = vsel %vm47, %v15, 0
  %v55 = vsel %vm47, %v16, 0
  %v58 = vsel %vm47, %v17, 0
  %v61 = vsel %vm47, %v18, 0
  %v64 = vsel %vm47, %v19, 0
  %v67 = vsel %vm47, %v20, 0
  %v70 = vsel %vm47, %v21, 0
  %v73 = vsel %vm47, %v22, 0
  %v76 = vsel %vm47, %v23, 0
  %v79 = vsel %vm47, %v24, 0
  %v82 = vsel %vm47, %v25, 0
  %v85 = vsel %vm47, %v26, 0
  %v88 = vsel %vm47, %v27, 0
  %v91 = vsel %vm47, %v28, 0
  %v94 = vsel %vm47, %v29, 0
  %v97 = vsel %vm47, %v30, 0
  %v100 = vsel %vm47, %v31, 0
  %v103 = vsel %vm47, %v32, 0
  %v106 = vsel %vm47, %v33, 0
  %v109 = vsel %vm47, %v34, 0
  %v112 = vsel %vm47, %v35, 0
  %v115 = vsel %vm47, %v36, 0
  %v118 = vsel %vm47, %v37, 0
  %v121 = vsel %vm47, %v38, 0
  %v124 = vsel %vm47, %v39, 0
  %v127 = vsel %vm47, %v40, 0
  %v130 = vsel %vm47, %v41, 0
  %v133 = vsel %vm47, %v42, 0
  %v136 = vsel %vm47, %v43, 0
  %v139 = vsel %vm47, %v44, 0
  %v142 = vsel %vm47, %v45, 0
  %144 = vmatprep.subr.mxu0 0.0
  %145 = vmatpush1.msra.mxu0 %v46
  %146 = vmatprep.subr.mxu0 0.0
  %147 = vmatpush1.msra.mxu0 0.0
  %148 = vmatprep.subr.mxu0 0.0
  %149 = vmatpush1.msra.mxu0 0.0
  %150 = vmatprep.subr.mxu0 0.0
  %151 = vmatpush1.msra.mxu0 0.0
  %152 = vmatprep.subr.mxu0 0.0
  %153 = vmatpush1.msra.mxu0 0.0
  %154 = vmatprep.subr.mxu0 0.0
  %155 = vmatpush1.msra.mxu0 0.0
  %156 = vmatprep.subr.mxu0 0.0
  %157 = vmatpush1.msra.mxu0 0.0
  %158 = vmatprep.subr.mxu0 0.0
  %159 = vmatpush1.msra.mxu0 0.0
  %160 = vmatprep.subr.mxu0 0.0
  %161 = vmatpush1.msra.mxu0 0.0
  %162 = vmatprep.subr.mxu0 0.0
  %163 = vmatpush1.msra.mxu0 0.0
  %164 = vmatprep.subr.mxu0 0.0
  %165 = vmatpush1.msra.mxu0 0.0
  %166 = vmatprep.subr.mxu0 0.0
  %167 = vmatpush1.msra.mxu0 0.0
  %168 = vmatprep.subr.mxu0 0.0
  %169 = vmatpush1.msra.mxu0 0.0
  %170 = vmatprep.subr.mxu0 0.0
  %171 = vmatpush1.msra.mxu0 0.0
  %172 = vmatprep.subr.mxu0 0.0
  %173 = vmatpush1.msra.mxu0 0.0
  %174 = vmatprep.subr.mxu0 0.0
  %175 = vmatpush1.msra.mxu0 0.0
  %176 = vmatprep.subr.mxu0 0.0
  %177 = vmatpush1.msra.mxu0 0.0
  %178 = vmatprep.subr.mxu0 0.0
  %179 = vmatpush1.msra.mxu0 0.0
  %180 = vmatprep.subr.mxu0 0.0
  %181 = vmatpush1.msra.mxu0 0.0
  %182 = vmatprep.subr.mxu0 0.0
  %183 = vmatpush1.msra.mxu0 0.0
  %184 = vmatprep.subr.mxu0 0.0
  %185 = vmatpush1.msra.mxu0 0.0
  %186 = vmatprep.subr.mxu0 0.0
  %187 = vmatpush1.msra.mxu0 0.0
  %188 = vmatprep.subr.mxu0 0.0
  %189 = vmatpush1.msra.mxu0 0.0
  %190 = vmatprep.subr.mxu0 0.0
  %191 = vmatpush1.msra.mxu0 0.0
  %192 = vmatprep.subr.mxu0 0.0
  %193 = vmatpush1.msra.mxu0 0.0
  %194 = vmatprep.subr.mxu0 0.0
  %195 = vmatpush1.msra.mxu0 0.0
  %196 = vmatprep.subr.mxu0 0.0
  %197 = vmatpush1.msra.mxu0 0.0
  %198 = vmatprep.subr.mxu0 0.0
  %199 = vmatpush1.msra.mxu0 0.0
  %200 = vmatprep.subr.mxu0 0.0
  %201 = vmatpush1.msra.mxu0 0.0
  %202 = vmatprep.subr.mxu0 0.0
  %203 = vmatpush1.msra.mxu0 0.0
  %204 = vmatprep.subr.mxu0 0.0
  %205 = vmatpush1.msra.mxu0 0.0
  %206 = vmatprep.subr.mxu0 0.0
  %207 = vmatpush1.msra.mxu0 0.0
  %208 = vmatprep.mubr.f32.mxu0 0.0
  %209 = vmatmul.mubr.f32.gmra.mrb[0].mxu0 %v49
  %v210 = vpop.f32.mrb[0].mxu0
  %v211 = vadd.f32 0.0, %v210
  %v212 = vpop.f32.mrb[0].mxu0
  %213 = vmatprep.mubr.f32.mxu0 0.0
  %214 = vmatmul.mubr.f32.gmra.mrb[0].mxu0 %v52
  %v215 = vpop.f32.mrb[0].mxu0
  %v216 = vadd.f32 0.0, %v215
  %v217 = vpop.f32.mrb[0].mxu0
  %218 = vmatprep.mubr.f32.mxu0 0.0
  %219 = vmatmul.mubr.f32.gmra.mrb[0].mxu0 %v55
  %v220 = vpop.f32.mrb[0].mxu0
  %v221 = vadd.f32 0.0, %v220
  %v222 = vpop.f32.mrb[0].mxu0
  %223 = vmatprep.mubr.f32.mxu0 0.0
  %224 = vmatmul.mubr.f32.gmra.mrb[0].mxu0 %v58
  %v225 = vpop.f32.mrb[0].mxu0
  %v226 = vadd.f32 0.0, %v225
  %v227 = vpop.f32.mrb[0].mxu0
  %228 = vmatprep.mubr.f32.mxu0 0.0
  %229 = vmatmul.mubr.f32.gmra.mrb[0].mxu0 %v61
  %v230 = vpop.f32.mrb[0].mxu0
  %v231 = vadd.f32 0.0, %v230
  %v232 = vpop.f32.mrb[0].mxu0
  %233 = vmatprep.mubr.f32.mxu0 0.0
  %234 = vmatmul.mubr.f32.gmra.mrb[0].mxu0 %v64
  %v235 = vpop.f32.mrb[0].mxu0
  %v236 = vadd.f32 0.0, %v235
  %v237 = vpop.f32.mrb[0].mxu0
  %238 = vmatprep.mubr.f32.mxu0 0.0
  %239 = vmatmul.mubr.f32.gmra.mrb[0].mxu0 %v67
  %v240 = vpop.f32.mrb[0].mxu0
  %v241 = vadd.f32 0.0, %v240
  %v242 = vpop.f32.mrb[0].mxu0
  %243 = vmatprep.mubr.f32.mxu0 0.0
  %244 = vmatmul.mubr.f32.gmra.mrb[0].mxu0 %v70
  %v245 = vpop.f32.mrb[0].mxu0
  %v246 = vadd.f32 0.0, %v245
  %v247 = vpop.f32.mrb[0].mxu0
  %248 = vmatprep.mubr.f32.mxu0 0.0
  %249 = vmatmul.mubr.f32.gmra.mrb[0].mxu0 %v73
  %v250 = vpop.f32.mrb[0].mxu0
  %v251 = vadd.f32 0.0, %v250
  %v252 = vpop.f32.mrb[0].mxu0
  %253 = vmatprep.mubr.f32.mxu0 0.0
  %254 = vmatmul.mubr.f32.gmra.mrb[0].mxu0 %v76
  %v255 = vpop.f32.mrb[0].mxu0
  %v256 = vadd.f32 0.0, %v255
  %v257 = vpop.f32.mrb[0].mxu0
  %258 = vmatprep.mubr.f32.mxu0 0.0
  %259 = vmatmul.mubr.f32.gmra.mrb[0].mxu0 %v79
  %v260 = vpop.f32.mrb[0].mxu0
  %v261 = vadd.f32 0.0, %v260
  %v262 = vpop.f32.mrb[0].mxu0
  %263 = vmatprep.mubr.f32.mxu0 0.0
  %264 = vmatmul.mubr.f32.gmra.mrb[0].mxu0 %v82
  %v265 = vpop.f32.mrb[0].mxu0
  %v266 = vadd.f32 0.0, %v265
  %v267 = vpop.f32.mrb[0].mxu0
  %268 = vmatprep.mubr.f32.mxu0 0.0
  %269 = vmatmul.mubr.f32.gmra.mrb[0].mxu0 %v85
  %v270 = vpop.f32.mrb[0].mxu0
  %v271 = vadd.f32 0.0, %v270
  %v272 = vpop.f32.mrb[0].mxu0
  %273 = vmatprep.mubr.f32.mxu0 0.0
  %274 = vmatmul.mubr.f32.gmra.mrb[0].mxu0 %v88
  %v275 = vpop.f32.mrb[0].mxu0
  %v276 = vadd.f32 0.0, %v275
  %v277 = vpop.f32.mrb[0].mxu0
  %278 = vmatprep.mubr.f32.mxu0 0.0
  %279 = vmatmul.mubr.f32.gmra.mrb[0].mxu0 %v91
  %v280 = vpop.f32.mrb[0].mxu0
  %v281 = vadd.f32 0.0, %v280
  %v282 = vpop.f32.mrb[0].mxu0
  %283 = vmatprep.mubr.f32.mxu0 0.0
  %284 = vmatmul.mubr.f32.gmra.mrb[0].mxu0 %v94
  %v285 = vpop.f32.mrb[0].mxu0
  %v286 = vadd.f32 0.0, %v285
  %v287 = vpop.f32.mrb[0].mxu0
  %288 = vmatprep.mubr.f32.mxu0 0.0
  %289 = vmatmul.mubr.f32.gmra.mrb[0].mxu0 %v97
  %v290 = vpop.f32.mrb[0].mxu0
  %v291 = vadd.f32 0.0, %v290
  %v292 = vpop.f32.mrb[0].mxu0
  %293 = vmatprep.mubr.f32.mxu0 0.0
  %294 = vmatmul.mubr.f32.gmra.mrb[0].mxu0 %v100
  %v295 = vpop.f32.mrb[0].mxu0
  %v296 = vadd.f32 0.0, %v295
  %v297 = vpop.f32.mrb[0].mxu0
  %298 = vmatprep.mubr.f32.mxu0 0.0
  %299 = vmatmul.mubr.f32.gmra.mrb[0].mxu0 %v103
  %v300 = vpop.f32.mrb[0].mxu0
  %v301 = vadd.f32 0.0, %v300
  %v302 = vpop.f32.mrb[0].mxu0
  %303 = vmatprep.mubr.f32.mxu0 0.0
  %304 = vmatmul.mubr.f32.gmra.mrb[0].mxu0 %v106
  %v305 = vpop.f32.mrb[0].mxu0
  %v306 = vadd.f32 0.0, %v305
  %v307 = vpop.f32.mrb[0].mxu0
  %308 = vmatprep.mubr.f32.mxu0 0.0
  %309 = vmatmul.mubr.f32.gmra.mrb[0].mxu0 %v109
  %v310 = vpop.f32.mrb[0].mxu0
  %v311 = vadd.f32 0.0, %v310
  %v312 = vpop.f32.mrb[0].mxu0
  %313 = vmatprep.mubr.f32.mxu0 0.0
  %314 = vmatmul.mubr.f32.gmra.mrb[0].mxu0 %v112
  %v315 = vpop.f32.mrb[0].mxu0
  %v316 = vadd.f32 0.0, %v315
  %v317 = vpop.f32.mrb[0].mxu0
  %318 = vmatprep.mubr.f32.mxu0 0.0
  %319 = vmatmul.mubr.f32.gmra.mrb[0].mxu0 %v115
  %v320 = vpop.f32.mrb[0].mxu0
  %v321 = vadd.f32 0.0, %v320
  %v322 = vpop.f32.mrb[0].mxu0
  %323 = vmatprep.mubr.f32.mxu0 0.0
  %324 = vmatmul.mubr.f32.gmra.mrb[0].mxu0 %v118
  %v325 = vpop.f32.mrb[0].mxu0
  %v326 = vadd.f32 0.0, %v325
  %v327 = vpop.f32.mrb[0].mxu0
  %328 = vmatprep.mubr.f32.mxu0 0.0
  %329 = vmatmul.mubr.f32.gmra.mrb[0].mxu0 %v121
  %v330 = vpop.f32.mrb[0].mxu0
  %v331 = vadd.f32 0.0, %v330
  %v332 = vpop.f32.mrb[0].mxu0
  %333 = vmatprep.mubr.f32.mxu0 0.0
  %334 = vmatmul.mubr.f32.gmra.mrb[0].mxu0 %v124
  %v335 = vpop.f32.mrb[0].mxu0
  %v336 = vadd.f32 0.0, %v335
  %v337 = vpop.f32.mrb[0].mxu0
  %338 = vmatprep.mubr.f32.mxu0 0.0
  %339 = vmatmul.mubr.f32.gmra.mrb[0].mxu0 %v127
  %v340 = vpop.f32.mrb[0].mxu0
  %v341 = vadd.f32 0.0, %v340
  %v342 = vpop.f32.mrb[0].mxu0
  %343 = vmatprep.mubr.f32.mxu0 0.0
  %344 = vmatmul.mubr.f32.gmra.mrb[0].mxu0 %v130
  %v345 = vpop.f32.mrb[0].mxu0
  %v346 = vadd.f32 0.0, %v345
  %v347 = vpop.f32.mrb[0].mxu0
  %348 = vmatprep.mubr.f32.mxu0 0.0
  %349 = vmatmul.mubr.f32.gmra.mrb[0].mxu0 %v133
  %v350 = vpop.f32.mrb[0].mxu0
  %v351 = vadd.f32 0.0, %v350
  %v352 = vpop.f32.mrb[0].mxu0
  %353 = vmatprep.mubr.f32.mxu0 0.0
  %354 = vmatmul.mubr.f32.gmra.mrb[0].mxu0 %v136
  %v355 = vpop.f32.mrb[0].mxu0
  %v356 = vadd.f32 0.0, %v355
  %v357 = vpop.f32.mrb[0].mxu0
  %358 = vmatprep.mubr.f32.mxu0 0.0
  %359 = vmatmul.mubr.f32.gmra.mrb[0].mxu0 %v139
  %v360 = vpop.f32.mrb[0].mxu0
  %v361 = vadd.f32 0.0, %v360
  %v362 = vpop.f32.mrb[0].mxu0
  %363 = vmatprep.mubr.f32.mxu0 0.0
  %364 = vmatmul.mubr.f32.gmra.mrb[0].mxu0 %v142
  %v365 = vpop.f32.mrb[0].mxu0
  %v366 = vadd.f32 0.0, %v365
  %v367 = vpop.f32.mrb[0].mxu0
  %368 = vdwg.mxu0
  %v369 = vmul.f32 %v211, 1.442695
  %v370 = vpow.pop %v369
  %v371 = vmul.f32 %v216, 1.442695
  %v372 = vpow.pop %v371
  %v373 = vmul.f32 %v221, 1.442695
  %v374 = vpow.pop %v373
  %v375 = vmul.f32 %v226, 1.442695
  %v376 = vpow.pop %v375
  %v377 = vmul.f32 %v231, 1.442695
  %v378 = vpow.pop %v377
  %v379 = vmul.f32 %v236, 1.442695
  %v380 = vpow.pop %v379
  %v381 = vmul.f32 %v241, 1.442695
  %v382 = vpow.pop %v381
  %v383 = vmul.f32 %v246, 1.442695
  %v384 = vpow.pop %v383
  %v385 = vmul.f32 %v251, 1.442695
  %v386 = vpow.pop %v385
  %v387 = vmul.f32 %v256, 1.442695
  %v388 = vpow.pop %v387
  %v389 = vmul.f32 %v261, 1.442695
  %v390 = vpow.pop %v389
  %v391 = vmul.f32 %v266, 1.442695
  %v392 = vpow.pop %v391
  %v393 = vmul.f32 %v271, 1.442695
  %v394 = vpow.pop %v393
  %v395 = vmul.f32 %v276, 1.442695
  %v396 = vpow.pop %v395
  %v397 = vmul.f32 %v281, 1.442695
  %v398 = vpow.pop %v397
  %v399 = vmul.f32 %v286, 1.442695
  %v400 = vpow.pop %v399
  %v401 = vmul.f32 %v291, 1.442695
  %v402 = vpow.pop %v401
  %v403 = vmul.f32 %v296, 1.442695
  %v404 = vpow.pop %v403
  %v405 = vmul.f32 %v301, 1.442695
  %v406 = vpow.pop %v405
  %v407 = vmul.f32 %v306, 1.442695
  %v408 = vpow.pop %v407
  %v409 = vmul.f32 %v311, 1.442695
  %v410 = vpow.pop %v409
  %v411 = vmul.f32 %v316, 1.442695
  %v412 = vpow.pop %v411
  %v413 = vmul.f32 %v321, 1.442695
  %v414 = vpow.pop %v413
  %v415 = vmul.f32 %v326, 1.442695
  %v416 = vpow.pop %v415
  %v417 = vmul.f32 %v331, 1.442695
  %v418 = vpow.pop %v417
  %v419 = vmul.f32 %v336, 1.442695
  %v420 = vpow.pop %v419
  %v421 = vmul.f32 %v341, 1.442695
  %v422 = vpow.pop %v421
  %v423 = vmul.f32 %v346, 1.442695
  %v424 = vpow.pop %v423
  %v425 = vmul.f32 %v351, 1.442695
  %v426 = vpow.pop %v425
  %v427 = vmul.f32 %v356, 1.442695
  %v428 = vpow.pop %v427
  %v429 = vmul.f32 %v361, 1.442695
  %v430 = vpow.pop %v429
  %v431 = vmul.f32 %v366, 1.442695
  %v432 = vpow.pop %v431
  %v433 = vld [vmem:[%s2] sm:$0xff]
  %v434 = vld [vmem:[%s2 + $0x8] sm:$0xff]
  %435 = vmatprep.subr.mxu0 0.0
  %436 = vmatpush1.msra.mxu0 %v370
  %437 = vmatprep.subr.mxu0 0.0
  %438 = vmatpush1.msra.mxu0 %v372
  %439 = vmatprep.subr.mxu0 0.0
  %440 = vmatpush1.msra.mxu0 %v374
  %441 = vmatprep.subr.mxu0 0.0
  %442 = vmatpush1.msra.mxu0 %v376
  %443 = vmatprep.subr.mxu0 0.0
  %444 = vmatpush1.msra.mxu0 %v378
  %445 = vmatprep.subr.mxu0 0.0
  %446 = vmatpush1.msra.mxu0 %v380
  %447 = vmatprep.subr.mxu0 0.0
  %448 = vmatpush1.msra.mxu0 %v382
  %449 = vmatprep.subr.mxu0 0.0
  %450 = vmatpush1.msra.mxu0 %v384
  %451 = vmatprep.subr.mxu0 0.0
  %452 = vmatpush1.msra.mxu0 %v386
  %453 = vmatprep.subr.mxu0 0.0
  %454 = vmatpush1.msra.mxu0 %v388
  %455 = vmatprep.subr.mxu0 0.0
  %456 = vmatpush1.msra.mxu0 %v390
  %457 = vmatprep.subr.mxu0 0.0
  %458 = vmatpush1.msra.mxu0 %v392
  %459 = vmatprep.subr.mxu0 0.0
  %460 = vmatpush1.msra.mxu0 %v394
  %461 = vmatprep.subr.mxu0 0.0
  %462 = vmatpush1.msra.mxu0 %v396
  %463 = vmatprep.subr.mxu0 0.0
  %464 = vmatpush1.msra.mxu0 %v398
  %465 = vmatprep.subr.mxu0 0.0
  %466 = vmatpush1.msra.mxu0 %v400
  %467 = vmatprep.subr.mxu0 0.0
  %468 = vmatpush1.msra.mxu0 %v402
  %469 = vmatprep.subr.mxu0 0.0
  %470 = vmatpush1.msra.mxu0 %v404
  %471 = vmatprep.subr.mxu0 0.0
  %472 = vmatpush1.msra.mxu0 %v406
  %473 = vmatprep.subr.mxu0 0.0
  %474 = vmatpush1.msra.mxu0 %v408
  %475 = vmatprep.subr.mxu0 0.0
  %476 = vmatpush1.msra.mxu0 %v410
  %477 = vmatprep.subr.mxu0 0.0
  %478 = vmatpush1.msra.mxu0 %v412
  %479 = vmatprep.subr.mxu0 0.0
  %480 = vmatpush1.msra.mxu0 %v414
  %481 = vmatprep.subr.mxu0 0.0
  %482 = vmatpush1.msra.mxu0 %v416
  %483 = vmatprep.subr.mxu0 0.0
  %484 = vmatpush1.msra.mxu0 %v418
  %485 = vmatprep.subr.mxu0 0.0
  %486 = vmatpush1.msra.mxu0 %v420
  %487 = vmatprep.subr.mxu0 0.0
  %488 = vmatpush1.msra.mxu0 %v422
  %489 = vmatprep.subr.mxu0 0.0
  %490 = vmatpush1.msra.mxu0 %v424
  %491 = vmatprep.subr.mxu0 0.0
  %492 = vmatpush1.msra.mxu0 %v426
  %493 = vmatprep.subr.mxu0 0.0
  %494 = vmatpush1.msra.mxu0 %v428
  %495 = vmatprep.subr.mxu0 0.0
  %496 = vmatpush1.msra.mxu0 %v430
  %497 = vmatprep.subr.mxu0 0.0
  %498 = vmatpush1.msra.mxu0 %v432
  %499 = vmatprep.mubr.f32.mxu0 %v434
  %500 = vmatmul.mubr.f32.gmra.mrb[0].mxu0 %v433
  %v501 = vpop.f32.mrb[0].mxu0
  %v502 = vadd.f32 0.0, %v501
  %v503 = vpop.f32.mrb[0].mxu0
  %504 = vdwg.mxu0
  %505 = vst [vmem:[%s3] sm:$0x1] %v502
  // Predicated region
  $region14: #{_forward.1} parent=0 // pred_check
    _
  $region15: #{_forward.1} parent=0 // pred_check_branch
    %507 = sbr.rel (0) target = $region17
  $region16: #{_forward.1} parent=0 // pred_region
    _
  $region17: #{_forward.1} parent=0 // pred_fallthru
    _
  // Predicated region
  $region18: #{_forward.1} parent=0 // pred_check
    _
  $region19: #{_forward.1} parent=0 // pred_check_branch
    %509 = sbr.rel (0) target = $region21
  $region20: #{_forward.1} parent=0 // pred_region
    _
  $region21: #{_forward.1} parent=0 // pred_fallthru
    _

</llo_original>
